<compile_context>
chip_gen: v7x
topology: tpu7x:2x2x1
jax: 0.10.0
libtpu: 0.0.40
codegen_flags: <defaults>
</compile_context>

<pallas_src>
import functools

import jax
import jax.numpy as jnp
import numpy as np
from jax.experimental import pallas as pl
from jax.experimental.pallas import tpu as pltpu


# ----------------------------- Pallas kernel -----------------------------
def _cluster_assign_kernel(x_ref, c_ref, inv_norm_ref, o_ref, *, approx_recip=True):
    # x_ref:        (TB, D)  input tile (f32 or bf16), streamed per grid step
    # c_ref:        (K,  D)  cluster centers, resident across the grid
    # inv_norm_ref: (K,  1)  1 / ||c_k||_2, resident (f32)
    # o_ref:        (K, TB)  soft assignment tile (f32), batch rows on lanes
    x = x_ref[...]
    c = c_ref[...]

    # (K, TB): contract over D on both operands -> batch rows land on lanes.
    s = jax.lax.dot_general(
        c, x,
        dimension_numbers=(((1,), (1,)), ((), ())),
        preferred_element_type=jnp.float32,
    )

    # assignment**2 / ||c||  (per-cluster reciprocal norm hoisted, lane-broadcast).
    soft = (s * s) * inv_norm_ref[...]

    # Numerically-stable softmax over the cluster (sublane) axis.
    m = jnp.max(soft, axis=0, keepdims=True)          # (1, TB)
    e = jnp.exp(soft - m)                              # (K, TB), full-lane VPU/EUP
    denom = jnp.sum(e, axis=0, keepdims=True)          # (1, TB)
    if approx_recip:
        o_ref[...] = (e * pl.reciprocal(denom, approx=True)).astype(o_ref.dtype)
    else:
        o_ref[...] = (e / denom).astype(o_ref.dtype)


# --------------------------- Tile-size planning ---------------------------
def _round_up(x, m):
    return ((x + m - 1) // m) * m


def _vmem_capacity_bytes():
    try:
        info = pltpu.get_tpu_info()
        cap = int(getattr(info, "vmem_capacity_bytes", 0) or 0)
        if cap > 0:
            return cap
    except Exception:
        pass
    return 64 * 1024 * 1024  # conservative: v7x per-TC VMEM


def _vmem_plan():
    """Returns (tile working-set budget, vmem_limit_bytes), generation-aware."""
    cap = _vmem_capacity_bytes()
    if cap <= 64 * 1024 * 1024:                 # v7x-class: 64 MiB per TC
        return 24 * 1024 * 1024, 40 * 1024 * 1024
    return 48 * 1024 * 1024, 80 * 1024 * 1024   # v5e / v6e: 128 MiB physical


def _padded_tile_bytes(rows, cols, itemsize):
    """VMEM bytes of a (rows, cols) tile after sublane / 128-lane padding."""
    sublane = max(8, 32 // itemsize)            # 8 f32, 16 bf16, 32 int8
    return _round_up(rows, sublane) * _round_up(cols, 128) * itemsize


def _pick_block_rows(batch_rows, d, k, x_itemsize, c_itemsize, budget_bytes):
    """Largest batch tile whose hardware-padded, double-buffered working set
    fits the generation-aware VMEM budget (and keeps >=4 grid steps on big B
    so v7x megacore has work to split)."""
    # Resident operands (constant index_map); count buffers twice to be safe.
    resident = (2 * _padded_tile_bytes(k, d, c_itemsize)
                + 2 * _padded_tile_bytes(k, 1, 4))
    # Per-row cost: double-buffered streamed x tile (TB, D) + double-buffered
    # lane-dense output tile (K, TB), using hardware-padded shapes.
    per_row = 2 * _round_up(d, 128) * x_itemsize + 2 * _round_up(k, 8) * 4
    avail = max(budget_bytes - resident, per_row * 128)
    tb = max(128, avail // max(per_row, 1))
    if batch_rows >= 4 * 128:
        tb = min(tb, _round_up(pl.cdiv(batch_rows, 4), 128))
    if tb >= batch_rows:
        return batch_rows                 # single full block (block == full dim)
    return max(128, (tb // 128) * 128)    # out-block lane dim must be 128-aligned


# ------------------------------- Wrapper -------------------------------
def cluster_assignment(batch: jax.Array, centers: jax.Array, block_rows=None, *,
                       approx_recip: bool = True):
    """Soft cluster assignment: softmax((batch @ C.T)**2 / ||C||_2, axis=-1)."""
    B, D = batch.shape
    K, D2 = centers.shape
    assert D == D2

    # Feed f32 / bf16 straight through; anything else is promoted to f32.
    if batch.dtype not in (jnp.float32, jnp.bfloat16):
        batch = batch.astype(jnp.float32)
    # One-time cast so the per-tile dot_general is not mixed-dtype.
    centers = centers.astype(batch.dtype)

    # Hoisted per-cluster 1/||c||_2 -- tiny (K, 1) column, computed once (f32).
    c32 = centers.astype(jnp.float32)
    inv_norm = 1.0 / jnp.sqrt(jnp.sum(c32 * c32, axis=-1, keepdims=True))

    x_itemsize = jnp.dtype(batch.dtype).itemsize
    c_itemsize = jnp.dtype(centers.dtype).itemsize
    budget, vmem_limit = _vmem_plan()

    if block_rows is None:
        block_rows = _pick_block_rows(B, D, K, x_itemsize, c_itemsize, budget)
    block_rows = int(block_rows)
    if block_rows >= B:
        block_rows = B
    else:
        # Batch rows are the output LANE axis: partial blocks must be
        # 128-aligned (also covers sublane packing of the streamed x tile).
        block_rows = max(128, (block_rows // 128) * 128)
        if block_rows >= B:
            block_rows = B
    grid = (pl.cdiv(B, block_rows),)

    cost = pl.CostEstimate(
        flops=2 * B * D * K + 6 * B * K,
        transcendentals=B * K,
        bytes_accessed=B * D * x_itemsize + B * K * 4 + K * D * c_itemsize + K * 4,
    )

    out_t = pl.pallas_call(
        functools.partial(_cluster_assign_kernel, approx_recip=approx_recip),
        out_shape=jax.ShapeDtypeStruct((K, B), jnp.float32),
        grid_spec=pltpu.PrefetchScalarGridSpec(
            num_scalar_prefetch=0,
            grid=grid,
            in_specs=[
                pl.BlockSpec((block_rows, D), lambda i: (i, 0)),   # streamed x
                pl.BlockSpec((K, D), lambda i: (0, 0)),            # resident centers
                pl.BlockSpec((K, 1), lambda i: (0, 0)),            # resident 1/||c||
            ],
            out_specs=pl.BlockSpec((K, block_rows), lambda i: (0, i)),
        ),
        compiler_params=pltpu.CompilerParams(
            dimension_semantics=("parallel",),   # megacore sharding on v7x
            vmem_limit_bytes=vmem_limit,
        ),
        cost_estimate=cost,
    )(batch, centers, inv_norm)

    # Back to the module's (batch, clusters) layout; tiny (K, B) transpose.
    return out_t.T


# ----------------------- Parameter init (module glue) -----------------------
def init_cluster_centers(key, cluster_number, embedding_dimension, orthogonal=True):
    """Reproduce ClusterAssignment.__init__: Xavier uniform + Gram-Schmidt."""
    # torch.nn.init.xavier_uniform_ on a (K, D) tensor: bound = sqrt(6/(K+D))
    bound = float(np.sqrt(6.0 / (cluster_number + embedding_dimension)))
    centers = np.asarray(
        jax.random.uniform(key, (cluster_number, embedding_dimension),
                           minval=-bound, maxval=bound, dtype=jnp.float32)
    ).astype(np.float64)

    if orthogonal:
        def project(u, v):
            return np.dot(u, v) / np.dot(u, u) * u

        ortho = np.zeros_like(centers)
        ortho[0] = centers[0]
        for i in range(1, cluster_number):
            proj = np.zeros_like(centers[i])
            for j in range(i):
                proj = proj + project(centers[j], centers[i])
            centers[i] = centers[i] - proj
            ortho[i] = centers[i] / np.linalg.norm(centers[i], ord=2)
        centers = ortho

    return jnp.asarray(centers, dtype=jnp.float32)


# ----------------------------- Reference (JAX) -----------------------------
def _reference(batch, centers):
    b = batch.astype(jnp.float32)
    c = centers.astype(jnp.float32)
    s = b @ c.T
    a = s ** 2
    norm = jnp.linalg.norm(c, axis=-1)
    soft = a / norm
    return jax.nn.softmax(soft, axis=-1)


if __name__ == "__main__":
    cluster_number = 4          # output_node_num
    embedding_dimension = 32    # input_feature_size
    batch_size = 8              # (batch * node_num) rows reaching DEC assignment

    key = jax.random.PRNGKey(0)
    k_centers, k_batch, k_big, k_odd = jax.random.split(key, 4)

    centers = init_cluster_centers(k_centers, cluster_number, embedding_dimension,
                                   orthogonal=True)
    batch = jax.random.normal(k_batch, (batch_size, embedding_dimension),
                              dtype=jnp.float32)

    out = jax.block_until_ready(cluster_assignment(batch, centers))
    ref = jax.block_until_ready(_reference(batch, centers))
    assert out.shape == (batch_size, cluster_number)
    np.testing.assert_allclose(np.asarray(out), np.asarray(ref),
                               rtol=2e-3, atol=2e-3)
    np.testing.assert_allclose(np.asarray(out).sum(axis=-1),
                               np.ones(batch_size), rtol=2e-3, atol=2e-3)

    # Multi-tile path: 256 rows with block_rows=128 -> 2-step grid exercising
    # the streamed-x / resident-centers pipeline and the lane-dense store.
    big = jax.random.normal(k_big, (256, embedding_dimension), dtype=jnp.float32)
    out_big = jax.block_until_ready(cluster_assignment(big, centers, block_rows=128))
    ref_big = jax.block_until_ready(_reference(big, centers))
    np.testing.assert_allclose(np.asarray(out_big), np.asarray(ref_big),
                               rtol=2e-3, atol=2e-3)

    # Ragged last block: 200 rows with block_rows=128 -> masked partial store.
    odd = jax.random.normal(k_odd, (200, embedding_dimension), dtype=jnp.float32)
    out_odd = jax.block_until_ready(cluster_assignment(odd, centers, block_rows=128))
    ref_odd = jax.block_until_ready(_reference(odd, centers))
    np.testing.assert_allclose(np.asarray(out_odd), np.asarray(ref_odd),
                               rtol=2e-3, atol=2e-3)

    print("KERNEL_OK")
</pallas_src>

<mosaic_0001>
module attributes {stable_mosaic.version = 11 : i64} {
  func.func @_cluster_assign_kernel(%arg0: i32, %arg1: memref<8x32xf32, #tpu.memory_space<vmem>>, %arg2: memref<4x32xf32, #tpu.memory_space<vmem>>, %arg3: memref<4x1xf32, #tpu.memory_space<vmem>>, %arg4: memref<4x8xf32, #tpu.memory_space<vmem>>) attributes {dimension_semantics = [#tpu.dimension_semantics<parallel>], iteration_bounds = array<i64: 1>, scalar_prefetch = 0 : i64, scratch_operands = 0 : i64, tpu.core_type = #tpu.core_type<tc>, window_params = [{transform_indices = @transform_0, window_bounds = array<i64: 8, 32>}, {pipeline_mode = #tpu.pipeline_mode<synchronous>, transform_indices = @transform_1, window_bounds = array<i64: 4, 32>}, {pipeline_mode = #tpu.pipeline_mode<synchronous>, transform_indices = @transform_2, window_bounds = array<i64: 4, 1>}, {transform_indices = @transform_3, window_bounds = array<i64: 4, 8>}]} {
    %c0 = arith.constant 0 : index
    %c0_0 = arith.constant 0 : index
    %0 = vector.load %arg1[%c0, %c0_0] : memref<8x32xf32, #tpu.memory_space<vmem>>, vector<8x32xf32>
    %c0_1 = arith.constant 0 : index
    %c0_2 = arith.constant 0 : index
    %1 = vector.load %arg2[%c0_1, %c0_2] : memref<4x32xf32, #tpu.memory_space<vmem>>, vector<4x32xf32>
    %cst = arith.constant dense<0.000000e+00> : vector<4x8xf32>
    %2 = tpu.matmul %1, %0, %cst {dimension_numbers = #tpu.dot_dimension_numbers<[1], [1], [0], [0], [0, 0, 1, 0], [], []>} : vector<4x32xf32>, vector<8x32xf32>, vector<4x8xf32> -> vector<4x8xf32>
    %3 = arith.mulf %2, %2 : vector<4x8xf32>
    %c0_3 = arith.constant 0 : index
    %c0_4 = arith.constant 0 : index
    %4 = vector.load %arg3[%c0_3, %c0_4] : memref<4x1xf32, #tpu.memory_space<vmem>>, vector<4x1xf32>
    %5 = vector.broadcast %4 : vector<4x1xf32> to vector<4x8xf32>
    %6 = arith.mulf %3, %5 : vector<4x8xf32>
    %cst_5 = arith.constant dense<0xFF800000> : vector<8xf32>
    %7 = vector.multi_reduction <maximumf>, %6, %cst_5 [0] : vector<4x8xf32> to vector<8xf32>
    %8 = vector.shape_cast %7 : vector<8xf32> to vector<1x8xf32>
    %9 = vector.broadcast %8 : vector<1x8xf32> to vector<4x8xf32>
    %10 = arith.subf %6, %9 : vector<4x8xf32>
    %11 = math.exp %10 : vector<4x8xf32>
    %cst_6 = arith.constant dense<0.000000e+00> : vector<8xf32>
    %12 = vector.multi_reduction <add>, %11, %cst_6 [0] : vector<4x8xf32> to vector<8xf32>
    %13 = vector.shape_cast %12 : vector<8xf32> to vector<1x8xf32>
    %14 = tpu.reciprocal %13 {approx = true} : vector<1x8xf32> -> vector<1x8xf32>
    %15 = vector.broadcast %14 : vector<1x8xf32> to vector<4x8xf32>
    %16 = arith.mulf %11, %15 : vector<4x8xf32>
    %c0_7 = arith.constant 0 : index
    %c0_8 = arith.constant 0 : index
    %17 = vector.load %arg4[%c0_7, %c0_8] : memref<4x8xf32, #tpu.memory_space<vmem>>, vector<4x8xf32>
    tpu.vector_store %arg4[%c0_7, %c0_8], %16 {strides = array<i32>} : memref<4x8xf32, #tpu.memory_space<vmem>>, vector<4x8xf32>,
    return
  }
  func.func @transform_0(%arg0: i32) -> (i32, i32) {
    %c0_i32 = arith.constant 0 : i32
    %c0_i32_0 = arith.constant 0 : i32
    return %arg0, %c0_i32 : i32, i32
  }
  func.func @transform_1(%arg0: i32) -> (i32, i32) {
    %c0_i32 = arith.constant 0 : i32
    %c0_i32_0 = arith.constant 0 : i32
    %c0_i32_1 = arith.constant 0 : i32
    return %c0_i32, %c0_i32_0 : i32, i32
  }
  func.func @transform_2(%arg0: i32) -> (i32, i32) {
    %c0_i32 = arith.constant 0 : i32
    %c0_i32_0 = arith.constant 0 : i32
    %c0_i32_1 = arith.constant 0 : i32
    return %c0_i32, %c0_i32_0 : i32, i32
  }
  func.func @transform_3(%arg0: i32) -> (i32, i32) {
    %c0_i32 = arith.constant 0 : i32
    %c0_i32_0 = arith.constant 0 : i32
    return %c0_i32, %arg0 : i32, i32
  }
}

</mosaic_0001>

<llo_original>
// kernel: tpu_custom_call.1
$region0: #{tpu_custom_call.1}
  #allocation0 [shape = 'u32[]', space=smem, size = 0x4, offset = 0x4, fixed_abs, tag = 'smem constant byte address 0x4 - core index']
  #allocation1 [shape = 'u32[144,128]{1,0:T(1,128)}', space=vmem, size = 0x12000, scoped, tag = 'internal scratch']
  %s0 = inlined_call_operand.hbm [shape: f32[8,32], index: 0, kind: input, shape index: {}]
  %s1 = inlined_call_operand.vmem [shape: f32[4,32], index: 1, kind: input, shape index: {}]
  %s2 = inlined_call_operand.vmem [shape: f32[4,1], index: 2, kind: input, shape index: {}]
  %s3 = inlined_call_operand.hbm [shape: f32[4,8], index: 3, kind: output, shape index: {}]
  %s4 = sld [smem:[#allocation0]]
  $region26: #{tpu_custom_call.1} parent=0
    _
  %s6 = ssub.s32 1, %s4
  %s7 = scalar_select 0, %s6, %s4
  $region1: #{tpu_custom_call.1} parent=0
    #allocation2 [shape = 'u8[4096]{0}', space=vmem, size = 0x1000, scoped, tag = 'input window, operand 0, single buffered']
    #allocation3 [shape = 's32[1]{0}', space=sflag, size = 0x4, scoped, tag = 'scoped memory for tpu_custom_call.1']
    #allocation4 [shape = 's32[1]{0}', space=sflag, size = 0x4, scoped, tag = 'scoped memory for tpu_custom_call.1']
    #allocation5 [shape = 'u8[2048]{0}', space=vmem, size = 0x800, scoped, tag = 'output window, operand 0, single buffered']
    %8 = vsyncpa [#allocation3], 0
    %9 = vsyncpa [#allocation4], 0
    // Predicated region
    $region2: #{tpu_custom_call.1} parent=1 // pred_check
      _
    $region3: #{tpu_custom_call.1} parent=1 // pred_check_branch
      %11 = sbr.rel (0) target = $region5
    $region4: #{tpu_custom_call.1} parent=1 // pred_region
      %s13 = ssub.s32 128, 128
      %14 = vsyncadd [#allocation3], %s13
      %s16 = sshll.u32 [#allocation2], 4
      %s17 = int_to_ptr.vmem [resolvable:$true] %s16
      %19 = dma.hbm_to_vmem [thread:$0]  %s0, 128, %s17, [#allocation3]
    $region5: #{tpu_custom_call.1} parent=1 // pred_fallthru
      _
    // Predicated region
    $region6: #{tpu_custom_call.1} parent=1 // pred_check
      _
    $region7: #{tpu_custom_call.1} parent=1 // pred_check_branch
      %21 = sbr.rel (0) target = $region9
    $region8: #{tpu_custom_call.1} parent=1 // pred_region
      _
    $region9: #{tpu_custom_call.1} parent=1 // pred_fallthru
      _
    // Predicated region
    $region10: #{tpu_custom_call.1} parent=1 // pred_check
      _
    $region11: #{tpu_custom_call.1} parent=1 // pred_check_branch
      %23 = sbr.rel (0) target = $region13
    $region12: #{tpu_custom_call.1} parent=1 // pred_region
      _
    $region13: #{tpu_custom_call.1} parent=1 // pred_fallthru
      _
    // Predicated region
    $region14: #{tpu_custom_call.1} parent=1 // pred_check
      _
    $region15: #{tpu_custom_call.1} parent=1 // pred_check_branch
      %25 = sbr.rel (0) target = $region17
    $region16: #{tpu_custom_call.1} parent=1 // pred_region
      %26 = dma.done [#allocation3], 128
    $region17: #{tpu_custom_call.1} parent=1 // pred_fallthru
      _
    %v27 = vld [vmem:[#allocation2] sm:$0xff]
    %v28 = vld [vmem:[%s1] sm:$0xf]
    %vm29 = vcmask 261120
    %v31 = vsel %vm29, %v28, 0
    %v34 = vsel %vm29, %v27, 0
    %36 = vmatprep.subr.mxu0 0.0
    %37 = vmatpush1.xpose.msra.mxu0 %v34
    %38 = vmatprep.subr.mxu0 0.0
    %39 = vmatpush1.xpose.msra.mxu0 0.0
    %40 = vmatprep.subr.mxu0 0.0
    %41 = vmatpush1.xpose.msra.mxu0 0.0
    %42 = vmatprep.subr.mxu0 0.0
    %43 = vmatpush1.xpose.msra.mxu0 0.0
    %44 = vmatprep.subr.mxu0 0.0
    %45 = vmatpush1.xpose.msra.mxu0 0.0
    %46 = vmatprep.subr.mxu0 0.0
    %47 = vmatpush1.xpose.msra.mxu0 0.0
    %48 = vmatprep.subr.mxu0 0.0
    %49 = vmatpush1.xpose.msra.mxu0 0.0
    %50 = vmatprep.subr.mxu0 0.0
    %51 = vmatpush1.xpose.msra.mxu0 0.0
    %52 = vmatprep.subr.mxu0 0.0
    %53 = vmatpush1.xpose.msra.mxu0 0.0
    %54 = vmatprep.subr.mxu0 0.0
    %55 = vmatpush1.xpose.msra.mxu0 0.0
    %56 = vmatprep.subr.mxu0 0.0
    %57 = vmatpush1.xpose.msra.mxu0 0.0
    %58 = vmatprep.subr.mxu0 0.0
    %59 = vmatpush1.xpose.msra.mxu0 0.0
    %60 = vmatprep.subr.mxu0 0.0
    %61 = vmatpush1.xpose.msra.mxu0 0.0
    %62 = vmatprep.subr.mxu0 0.0
    %63 = vmatpush1.xpose.msra.mxu0 0.0
    %64 = vmatprep.subr.mxu0 0.0
    %65 = vmatpush1.xpose.msra.mxu0 0.0
    %66 = vmatprep.subr.mxu0 0.0
    %67 = vmatpush1.xpose.msra.mxu0 0.0
    %68 = vmatprep.subr.mxu0 0.0
    %69 = vmatpush1.xpose.msra.mxu0 0.0
    %70 = vmatprep.subr.mxu0 0.0
    %71 = vmatpush1.xpose.msra.mxu0 0.0
    %72 = vmatprep.subr.mxu0 0.0
    %73 = vmatpush1.xpose.msra.mxu0 0.0
    %74 = vmatprep.subr.mxu0 0.0
    %75 = vmatpush1.xpose.msra.mxu0 0.0
    %76 = vmatprep.subr.mxu0 0.0
    %77 = vmatpush1.xpose.msra.mxu0 0.0
    %78 = vmatprep.subr.mxu0 0.0
    %79 = vmatpush1.xpose.msra.mxu0 0.0
    %80 = vmatprep.subr.mxu0 0.0
    %81 = vmatpush1.xpose.msra.mxu0 0.0
    %82 = vmatprep.subr.mxu0 0.0
    %83 = vmatpush1.xpose.msra.mxu0 0.0
    %84 = vmatprep.subr.mxu0 0.0
    %85 = vmatpush1.xpose.msra.mxu0 0.0
    %86 = vmatprep.subr.mxu0 0.0
    %87 = vmatpush1.xpose.msra.mxu0 0.0
    %88 = vmatprep.subr.mxu0 0.0
    %89 = vmatpush1.xpose.msra.mxu0 0.0
    %90 = vmatprep.subr.mxu0 0.0
    %91 = vmatpush1.xpose.msra.mxu0 0.0
    %92 = vmatprep.subr.mxu0 0.0
    %93 = vmatpush1.xpose.msra.mxu0 0.0
    %94 = vmatprep.subr.mxu0 0.0
    %95 = vmatpush1.xpose.msra.mxu0 0.0
    %96 = vmatprep.subr.mxu0 0.0
    %97 = vmatpush1.xpose.msra.mxu0 0.0
    %98 = vmatprep.subr.mxu0 0.0
    %99 = vmatpush1.xpose.msra.mxu0 0.0
    %100 = vmatprep.mubr.f32.mxu0 0.0
    %101 = vmatmul.mubr.f32.gmra.mrb[0].mxu0 %v31
    %v102 = vpop.f32.mrb[0].mxu0
    %v103 = vadd.f32 0.0, %v102
    %v104 = vpop.f32.mrb[0].mxu0
    %105 = vdwg.mxu0
    %v106 = vmul.f32 %v103, %v103
    %v107 = vld [vmem:[%s2] sm:$0xf]
    %109 = vset.pattern.permute.xlu0 0
    %110 = vperm.xlu0 %109, %v107
    %v111 = vpop.permute.xlu0 %110
    %v113 = vmul.f32 %v106, %v111
    %vm114 = vcmask 60416
    %v115 = vsel %vm114, %v113, -inf
    %v116 = vrot.slane %v115, 4
    %v117 = vmax.f32 %v115, %v116
    %v118 = vrot.slane %v117, 2
    %v119 = vmax.f32 %v117, %v118
    %v120 = vrot.slane %v119, 1
    %v121 = vmax.f32 %v119, %v120
    %v122 = vsub.f32 %v113, %v121
    %v123 = vmul.f32 %v122, 1.442695
    %v124 = vpow.pop %v123
    %v125 = vsel %vm114, %v124, 0.0
    %v126 = vrot.slane %v125, 4
    %v127 = vadd.f32 %v125, %v126
    %v128 = vrot.slane %v127, 2
    %v129 = vadd.f32 %v127, %v128
    %v130 = vrot.slane %v129, 1
    %v131 = vadd.f32 %v129, %v130
    %v132 = vrcp.pop %v131
    %v133 = vmul.f32 %v124, %v132
    %134 = vst.msk [vmem:[#allocation5] sm:$0xf] %vm114, %v133
    // Predicated region
    $region18: #{tpu_custom_call.1} parent=1 // pred_check
      _
    $region19: #{tpu_custom_call.1} parent=1 // pred_check_branch
      %136 = sbr.rel (0) target = $region21
    $region20: #{tpu_custom_call.1} parent=1 // pred_region
      %s138 = ssub.s32 64, 64
      %139 = vsyncadd [#allocation4], %s138
      %s141 = sshll.u32 [#allocation5], 4
      %s142 = int_to_ptr.vmem [resolvable:$true] %s141
      %144 = dma.vmem_to_hbm [thread:$0]  %s142, 64, %s3, [#allocation4]
    $region21: #{tpu_custom_call.1} parent=1 // pred_fallthru
      _
    // Predicated region
    $region22: #{tpu_custom_call.1} parent=1 // pred_check
      _
    $region23: #{tpu_custom_call.1} parent=1 // pred_check_branch
      %146 = sbr.rel (0) target = $region25
    $region24: #{tpu_custom_call.1} parent=1 // pred_region
      %147 = dma.done [#allocation4], 64
    $region25: #{tpu_custom_call.1} parent=1 // pred_fallthru
      _
    %148 = vsyncpa [#allocation3], 1
    %149 = vsyncpa [#allocation4], 1

</llo_original>
